<compile_context>
chip_gen: v5e
topology: v5e:2x2
jax: 0.10.0
libtpu: 0.0.40
codegen_flags: <defaults>
</compile_context>

<pallas_src>
import jax
import jax.numpy as jnp
import numpy as np
from jax.experimental import pallas as pl
from jax.experimental.pallas import tpu as pltpu


def _make_kernel(off_y: int, off_z: int):
    """Kernel closure carrying the static vocab offsets of the fused table."""

    def kernel(coords_ref, table_ref, out_ref):
        coords = coords_ref[...]                       # (tile, 4) int32
        xi = coords[:, 1:2]                            # (tile, 1)
        yi = coords[:, 2:3] + off_y
        zi = coords[:, 3:4] + off_z

        tile = coords.shape[0]
        v_pad = table_ref.shape[0]                     # multiple of 128
        iota = jax.lax.broadcasted_iota(jnp.int32, (tile, v_pad), 1)
        # x/y/z occupy disjoint vocab ranges -> one fused one-hot, one matmul.
        onehot = ((iota == xi) | (iota == yi) | (iota == zi)).astype(table_ref.dtype)

        out = jnp.dot(onehot, table_ref[...], preferred_element_type=jnp.float32)
        out_ref[...] = out.astype(out_ref.dtype)

    return kernel


def _round_up(v: int, m: int) -> int:
    return ((v + m - 1) // m) * m


def _choose_tile(n_rows: int, d_pad: int, v_pad: int, requested_tn: int,
                 vmem_budget_bytes: int = 20 << 20) -> int:
    """Largest row tile that fits the VMEM budget (double-buffered coords/out
    tiles + resident table + one-hot), a multiple of 8; split into >=2 grid
    steps only when there is enough work for both v7x TensorCores."""
    n8 = _round_up(max(n_rows, 8), 8)
    tile = max(8, min((requested_tn // 8) * 8, n8))

    def vmem_bytes(t):
        coords_tile = t * 4 * 4
        out_tile = t * d_pad * 4
        onehot = t * v_pad * 4
        table = v_pad * d_pad * 4
        return 2 * (coords_tile + out_tile) + onehot + table

    while tile > 8 and vmem_bytes(tile) > vmem_budget_bytes:
        tile = max(8, ((tile // 2) // 8) * 8)

    # Only force a >=2-step grid when each core would still get >=512 rows.
    if n8 // tile < 2 and n8 >= 1024:
        tile = max(8, ((n8 // 2) // 8) * 8)
    return tile


def learned_positional_encoding(coords, x_emb, y_emb, z_emb, s_emb,
                                stride=1, *, tn=512, out_dtype=jnp.float32):
    """coords: (N, 4) int. Returns (N, d_model) out_dtype."""
    N = coords.shape[0]
    d_model = x_emb.shape[1]

    # --- Fuse tables: fold the (constant) stride row into the x table, then
    #     concatenate x/y/z along the vocab axis. Done once per call in XLA.
    fused = jnp.concatenate(
        [x_emb + s_emb[stride][None, :], y_emb, z_emb], axis=0
    ).astype(jnp.float32)
    off_y = x_emb.shape[0]
    off_z = x_emb.shape[0] + y_emb.shape[0]
    v_tot = fused.shape[0]

    # --- Lane-dense one-hot / MXU contraction dim: pad vocab to 128 multiple.
    v_pad = _round_up(v_tot, 128)
    # --- Lane-dense output store: pad d_model to 128 multiple.
    d_pad = _round_up(d_model, 128)
    if (v_pad != v_tot) or (d_pad != d_model):
        fused = jnp.pad(fused, ((0, v_pad - v_tot), (0, d_pad - d_model)))

    # --- Row tiling: pick a big VMEM-safe tile and pad N up to a multiple.
    tile = _choose_tile(N, d_pad, v_pad, tn)
    n_pad = _round_up(max(N, tile), tile)
    coords32 = coords.astype(jnp.int32)
    if n_pad != N:
        coords32 = jnp.pad(coords32, ((0, n_pad - N), (0, 0)))  # idx-0 rows, discarded

    kernel = _make_kernel(off_y, off_z)

    out_padded = pl.pallas_call(
        kernel,
        out_shape=jax.ShapeDtypeStruct((n_pad, d_pad), out_dtype),
        grid_spec=pltpu.PrefetchScalarGridSpec(
            num_scalar_prefetch=0,
            grid=(n_pad // tile,),
            in_specs=[
                pl.BlockSpec((tile, 4), lambda i: (i, 0)),        # coords rows
                pl.BlockSpec((v_pad, d_pad), lambda i: (0, 0)),   # fused table (resident)
            ],
            out_specs=pl.BlockSpec((tile, d_pad), lambda i: (i, 0)),
        ),
        compiler_params=pltpu.CompilerParams(
            dimension_semantics=("parallel",),
            vmem_limit_bytes=32 << 20,
        ),
    )(coords32, fused)

    return out_padded[:N, :d_model]


if __name__ == "__main__":
    # Small, deterministic setup (mirrors nn.Embedding init ~ N(0, 1)).
    d_model, max_x, max_y, max_z, max_stride = 32, 16, 16, 16, 8
    N = 16
    stride = 2

    key = jax.random.PRNGKey(0)
    kx, ky, kz, ks, kc = jax.random.split(key, 5)
    x_emb = jax.random.normal(kx, (max_x, d_model), dtype=jnp.float32)
    y_emb = jax.random.normal(ky, (max_y, d_model), dtype=jnp.float32)
    z_emb = jax.random.normal(kz, (max_z, d_model), dtype=jnp.float32)
    s_emb = jax.random.normal(ks, (max_stride, d_model), dtype=jnp.float32)

    kc0, kc1, kc2, kc3 = jax.random.split(kc, 4)
    coords = jnp.stack(
        [
            jax.random.randint(kc0, (N,), 0, 4, dtype=jnp.int32),       # col 0: unused ids
            jax.random.randint(kc1, (N,), 0, max_x, dtype=jnp.int32),   # x
            jax.random.randint(kc2, (N,), 0, max_y, dtype=jnp.int32),   # y
            jax.random.randint(kc3, (N,), 0, max_z, dtype=jnp.int32),   # z
        ],
        axis=1,
    )  # (N, 4) int32

    out = learned_positional_encoding(coords, x_emb, y_emb, z_emb, s_emb, stride=stride)
    out = jax.block_until_ready(out)

    # Pure-JAX reference (same semantics as the PyTorch forward).
    ref = (
        x_emb[coords[:, 1]]
        + y_emb[coords[:, 2]]
        + z_emb[coords[:, 3]]
        + s_emb[jnp.full((N,), stride, dtype=jnp.int32)]
    )
    np.testing.assert_allclose(np.asarray(out), np.asarray(ref), rtol=1e-5, atol=1e-5)

    print("KERNEL_OK")
</pallas_src>

<mosaic_0001>
module attributes {stable_mosaic.version = 11 : i64} {
  func.func @kernel(%arg0: i32, %arg1: memref<16x4xi32, #tpu.memory_space<vmem>>, %arg2: memref<128x128xf32, #tpu.memory_space<vmem>>, %arg3: memref<16x128xf32, #tpu.memory_space<vmem>>) attributes {dimension_semantics = [#tpu.dimension_semantics<parallel>], iteration_bounds = array<i64: 1>, scalar_prefetch = 0 : i64, scratch_operands = 0 : i64, tpu.core_type = #tpu.core_type<tc>, window_params = [{transform_indices = @transform_0, window_bounds = array<i64: 16, 4>}, {pipeline_mode = #tpu.pipeline_mode<synchronous>, transform_indices = @transform_1, window_bounds = array<i64: 128, 128>}, {transform_indices = @transform_2, window_bounds = array<i64: 16, 128>}]} {
    %c0 = arith.constant 0 : index
    %c0_0 = arith.constant 0 : index
    %0 = vector.load %arg1[%c0, %c0_0] : memref<16x4xi32, #tpu.memory_space<vmem>>, vector<16x4xi32>
    %1 = vector.extract_strided_slice %0 {offsets = [0, 1], sizes = [16, 1], strides = [1, 1]} : vector<16x4xi32> to vector<16x1xi32>
    %2 = vector.extract_strided_slice %0 {offsets = [0, 2], sizes = [16, 1], strides = [1, 1]} : vector<16x4xi32> to vector<16x1xi32>
    %c16_i32 = arith.constant 16 : i32
    %3 = vector.broadcast %c16_i32 : i32 to vector<16x1xi32>
    %4 = arith.addi %2, %3 : vector<16x1xi32>
    %5 = vector.extract_strided_slice %0 {offsets = [0, 3], sizes = [16, 1], strides = [1, 1]} : vector<16x4xi32> to vector<16x1xi32>
    %c32_i32 = arith.constant 32 : i32
    %6 = vector.broadcast %c32_i32 : i32 to vector<16x1xi32>
    %7 = arith.addi %5, %6 : vector<16x1xi32>
    %8 = tpu.iota {dimensions = array<i32: 1>} : vector<16x128xi32>
    %9 = vector.broadcast %1 : vector<16x1xi32> to vector<16x128xi32>
    %10 = arith.cmpi eq, %8, %9 : vector<16x128xi32>
    %11 = vector.broadcast %4 : vector<16x1xi32> to vector<16x128xi32>
    %12 = arith.cmpi eq, %8, %11 : vector<16x128xi32>
    %13 = arith.ori %10, %12 : vector<16x128xi1>
    %14 = vector.broadcast %7 : vector<16x1xi32> to vector<16x128xi32>
    %15 = arith.cmpi eq, %8, %14 : vector<16x128xi32>
    %16 = arith.ori %13, %15 : vector<16x128xi1>
    %17 = arith.extui %16 : vector<16x128xi1> to vector<16x128xi32>
    %18 = arith.sitofp %17 : vector<16x128xi32> to vector<16x128xf32>
    %c0_1 = arith.constant 0 : index
    %c0_2 = arith.constant 0 : index
    %19 = vector.load %arg2[%c0_1, %c0_2] : memref<128x128xf32, #tpu.memory_space<vmem>>, vector<128x128xf32>
    %cst = arith.constant dense<0.000000e+00> : vector<16x128xf32>
    %20 = tpu.matmul %18, %19, %cst {dimension_numbers = #tpu.dot_dimension_numbers<[1], [0], [0], [1], [0, 0, 1, 1], [], []>} : vector<16x128xf32>, vector<128x128xf32>, vector<16x128xf32> -> vector<16x128xf32>
    %c0_3 = arith.constant 0 : index
    %c0_4 = arith.constant 0 : index
    %21 = vector.load %arg3[%c0_3, %c0_4] : memref<16x128xf32, #tpu.memory_space<vmem>>, vector<16x128xf32>
    tpu.vector_store %arg3[%c0_3, %c0_4], %20 {strides = array<i32>} : memref<16x128xf32, #tpu.memory_space<vmem>>, vector<16x128xf32>,
    return
  }
  func.func @transform_0(%arg0: i32) -> (i32, i32) {
    %c0_i32 = arith.constant 0 : i32
    %c0_i32_0 = arith.constant 0 : i32
    return %arg0, %c0_i32 : i32, i32
  }
  func.func @transform_1(%arg0: i32) -> (i32, i32) {
    %c0_i32 = arith.constant 0 : i32
    %c0_i32_0 = arith.constant 0 : i32
    %c0_i32_1 = arith.constant 0 : i32
    return %c0_i32, %c0_i32_0 : i32, i32
  }
  func.func @transform_2(%arg0: i32) -> (i32, i32) {
    %c0_i32 = arith.constant 0 : i32
    %c0_i32_0 = arith.constant 0 : i32
    return %arg0, %c0_i32 : i32, i32
  }
}

</mosaic_0001>

<llo_original>
// kernel: tpu_custom_call.1
$region0: #{tpu_custom_call.1}
  #allocation0 [shape = 'u32[]', space=smem, size = 0x4, offset = 0x4, fixed_abs, tag = 'smem constant byte address 0x4 - core index']
  #allocation1 [shape = 'u32[72,128]{1,0:T(1,128)}', space=vmem, size = 0x9000, scoped, tag = 'internal scratch']
  %s0 = inlined_call_operand.vmem [shape: s32[16,4], index: 0, kind: input, shape index: {}]
  %s1 = inlined_call_operand.hbm [shape: f32[128,128], index: 1, kind: input, shape index: {}]
  %s2 = inlined_call_operand.hbm [shape: f32[16,128], index: 2, kind: output, shape index: {}]
  %s3 = sld [smem:[#allocation0]]
  $region22: #{tpu_custom_call.1} parent=0
    _
  %s5 = ssub.s32 1, %s3
  %s6 = scalar_select 0, %s5, %s3
  $region1: #{tpu_custom_call.1} parent=0
    #allocation2 [shape = 'u8[65536]{0}', space=vmem, size = 0x10000, scoped, tag = 'input window, operand 1, single buffered']
    #allocation3 [shape = 's32[1]{0}', space=sflag, size = 0x4, scoped, tag = 'scoped memory for tpu_custom_call.1']
    #allocation4 [shape = 's32[1]{0}', space=sflag, size = 0x4, scoped, tag = 'scoped memory for tpu_custom_call.1']
    #allocation5 [shape = 'u8[8192]{0}', space=vmem, size = 0x2000, scoped, tag = 'output window, operand 0, single buffered']
    %7 = vsyncpa [#allocation3], 0
    %8 = vsyncpa [#allocation4], 0
    // Predicated region
    $region2: #{tpu_custom_call.1} parent=1 // pred_check
      _
    $region3: #{tpu_custom_call.1} parent=1 // pred_check_branch
      %10 = sbr.rel (0) target = $region5
    $region4: #{tpu_custom_call.1} parent=1 // pred_region
      _
    $region5: #{tpu_custom_call.1} parent=1 // pred_fallthru
      _
    // Predicated region
    $region6: #{tpu_custom_call.1} parent=1 // pred_check
      _
    $region7: #{tpu_custom_call.1} parent=1 // pred_check_branch
      %12 = sbr.rel (0) target = $region9
    $region8: #{tpu_custom_call.1} parent=1 // pred_region
      %14 = vsyncadd [#allocation3], 0
      %s15 = sshll.u32 %s1, 4
      %s16 = int_to_ptr.hbm [resolvable:$true] %s15
      %s17 = sshll.u32 [#allocation2], 4
      %s18 = int_to_ptr.vmem [resolvable:$true] %s17
      %23 = dma.hbm_to_vmem [thread:$0]  %s16, 2048, %s18, [#allocation3], 128, 128, 8
    $region9: #{tpu_custom_call.1} parent=1 // pred_fallthru
      _
    // Predicated region
    $region10: #{tpu_custom_call.1} parent=1 // pred_check
      _
    $region11: #{tpu_custom_call.1} parent=1 // pred_check_branch
      %25 = sbr.rel (0) target = $region13
    $region12: #{tpu_custom_call.1} parent=1 // pred_region
      %27 = dma.done [#allocation3], 2048
    $region13: #{tpu_custom_call.1} parent=1 // pred_fallthru
      _
    %v28 = vld [vmem:[%s0] sm:$0xff]
    %v29 = vld [vmem:[%s0 + $0x8] sm:$0xff]
    %v30 = vadd.s32 %v28, 16
    %v31 = vadd.s32 %v29, 16
    %v32 = vadd.s32 %v28, 32
    %v33 = vadd.s32 %v29, 32
    %v34 = vlaneseq
    %v35 = vand.u32 %v34, 127
    %36 = vset.pattern.permute.xlu0 1
    %37 = vperm.xlu0 %36, %v28
    %v38 = vpop.permute.xlu0 %37
    %39 = vset.pattern.permute.xlu0 1
    %40 = vperm.xlu0 %39, %v29
    %v41 = vpop.permute.xlu0 %40
    %vm42 = vcmp.eq.s32.totalorder %v35, %v38
    %vm43 = vcmp.eq.s32.totalorder %v35, %v41
    %44 = vset.pattern.permute.xlu0 2
    %45 = vperm.xlu0 %44, %v30
    %v46 = vpop.permute.xlu0 %45
    %47 = vset.pattern.permute.xlu0 2
    %48 = vperm.xlu0 %47, %v31
    %v49 = vpop.permute.xlu0 %48
    %vm50 = vcmp.eq.s32.totalorder %v35, %v46
    %vm51 = vcmp.eq.s32.totalorder %v35, %v49
    %vm52 = vmor %vm42, %vm50
    %vm53 = vmor %vm43, %vm51
    %54 = vset.pattern.permute.xlu0 3
    %55 = vperm.xlu0 %54, %v32
    %v56 = vpop.permute.xlu0 %55
    %57 = vset.pattern.permute.xlu0 3
    %58 = vperm.xlu0 %57, %v33
    %v59 = vpop.permute.xlu0 %58
    %vm60 = vcmp.eq.s32.totalorder %v35, %v56
    %vm61 = vcmp.eq.s32.totalorder %v35, %v59
    %vm62 = vmor %vm52, %vm60
    %vm63 = vmor %vm53, %vm61
    %v64 = vsel %vm62, 1, 0
    %v65 = vsel %vm63, 1, 0
    %v66 = vcvt.s32.f32 %v64
    %v67 = vcvt.s32.f32 %v65
    %v68 = vld [vmem:[#allocation2] sm:$0xff]
    %v69 = vld [vmem:[#allocation2 + $0x8] sm:$0xff]
    %v70 = vld [vmem:[#allocation2 + $0x10] sm:$0xff]
    %v71 = vld [vmem:[#allocation2 + $0x18] sm:$0xff]
    %v72 = vld [vmem:[#allocation2 + $0x20] sm:$0xff]
    %v73 = vld [vmem:[#allocation2 + $0x28] sm:$0xff]
    %v74 = vld [vmem:[#allocation2 + $0x30] sm:$0xff]
    %v75 = vld [vmem:[#allocation2 + $0x38] sm:$0xff]
    %v76 = vld [vmem:[#allocation2 + $0x40] sm:$0xff]
    %v77 = vld [vmem:[#allocation2 + $0x48] sm:$0xff]
    %v78 = vld [vmem:[#allocation2 + $0x50] sm:$0xff]
    %v79 = vld [vmem:[#allocation2 + $0x58] sm:$0xff]
    %v80 = vld [vmem:[#allocation2 + $0x60] sm:$0xff]
    %v81 = vld [vmem:[#allocation2 + $0x68] sm:$0xff]
    %v82 = vld [vmem:[#allocation2 + $0x70] sm:$0xff]
    %v83 = vld [vmem:[#allocation2 + $0x78] sm:$0xff]
    %84 = vmatpush.msra.mxu0 %v83
    %85 = vmatpush.msra.mxu0 %v82
    %86 = vmatpush.msra.mxu0 %v81
    %87 = vmatpush.msra.mxu0 %v80
    %88 = vmatpush.msra.mxu0 %v79
    %89 = vmatpush.msra.mxu0 %v78
    %90 = vmatpush.msra.mxu0 %v77
    %91 = vmatpush.msra.mxu0 %v76
    %92 = vmatpush.msra.mxu0 %v75
    %93 = vmatpush.msra.mxu0 %v74
    %94 = vmatpush.msra.mxu0 %v73
    %95 = vmatpush.msra.mxu0 %v72
    %96 = vmatpush.msra.mxu0 %v71
    %97 = vmatpush.msra.mxu0 %v70
    %98 = vmatpush.msra.mxu0 %v69
    %99 = vmatpush.msra.mxu0 %v68
    %100 = vmatmul.f32.gmra.mxu0 %v66
    %v101 = vpop.f32.mrf.mxu0
    %v102 = vadd.f32 0.0, %v101
    %103 = vmatmul.f32.gmra.mxu0 %v67
    %v104 = vpop.f32.mrf.mxu0
    %v105 = vadd.f32 0.0, %v104
    %106 = vdwg.mxu0
    %107 = vst [vmem:[#allocation5] sm:$0xff] %v102
    %108 = vst [vmem:[#allocation5 + $0x8] sm:$0xff] %v105
    // Predicated region
    $region14: #{tpu_custom_call.1} parent=1 // pred_check
      _
    $region15: #{tpu_custom_call.1} parent=1 // pred_check_branch
      %110 = sbr.rel (0) target = $region17
    $region16: #{tpu_custom_call.1} parent=1 // pred_region
      %112 = vsyncadd [#allocation4], 0
      %s113 = sshll.u32 [#allocation5], 4
      %s114 = int_to_ptr.vmem [resolvable:$true] %s113
      %s115 = sshll.u32 %s2, 4
      %s116 = int_to_ptr.hbm [resolvable:$true] %s115
      %121 = dma.vmem_to_hbm [thread:$0]  %s114, 256, %s116, [#allocation4], 128, 128, 8
    $region17: #{tpu_custom_call.1} parent=1 // pred_fallthru
      _
    // Predicated region
    $region18: #{tpu_custom_call.1} parent=1 // pred_check
      _
    $region19: #{tpu_custom_call.1} parent=1 // pred_check_branch
      %123 = sbr.rel (0) target = $region21
    $region20: #{tpu_custom_call.1} parent=1 // pred_region
      %125 = dma.done [#allocation4], 256
    $region21: #{tpu_custom_call.1} parent=1 // pred_fallthru
      _
    %126 = vsyncpa [#allocation3], 1
    %127 = vsyncpa [#allocation4], 1

</llo_original>
